<compile_context>
chip_gen: v5e
topology: v5e:2x2
jax: 0.10.0
libtpu: 0.0.40
codegen_flags: <defaults>
</compile_context>

<pallas_src>
import functools

import numpy as np
import jax
import jax.numpy as jnp
from jax import lax
from jax.experimental import pallas as pl
from jax.experimental.pallas import tpu as pltpu

NEG = -1.0e30  # finite stand-in for -inf (avoids inf-inf NaNs)


def _round_up(x, m):
    return ((x + m - 1) // m) * m


# ----------------------------------------------------------------------------
# Kernel A: dropout + Linear (bf16 MXU) + log_softmax over (padded) vocab.
# Grid = (B, T_pad // TT); each step handles one (1, TT, D) time tile.
# ----------------------------------------------------------------------------
def _linear_logsoftmax_kernel(seed_ref, x_ref, w_ref, b_ref, out_ref, *, drop_p, tile_t):
    x = x_ref[0]  # (TT, D) f32

    if drop_p > 0.0:
        # Deterministic counter-based hash PRNG in plain int32 ops (portable to both
        # Mosaic and interpret mode; pltpu.prng_* has no CPU/interpret lowering).
        # Stream depends on (seed, batch, global time index, feature) so tiles never
        # reuse the same dropout stream.
        t0 = pl.program_id(1) * tile_t
        gt = lax.broadcasted_iota(jnp.int32, x.shape, 0) + t0   # global time index
        gd = lax.broadcasted_iota(jnp.int32, x.shape, 1)        # feature index
        h = gt * jnp.int32(x.shape[1]) + gd                     # unique linear index
        h = h + (seed_ref[0] + pl.program_id(0) * jnp.int32(1000003)) * jnp.int32(2654435)
        # integer avalanche (wrapping int32 arithmetic)
        h = h ^ (h >> 15)
        h = h * jnp.int32(0x45D9F3B)
        h = h ^ (h >> 13)
        h = h * jnp.int32(0x2C1B3C6D)
        h = h ^ (h >> 16)
        h = h & jnp.int32(0x7FFFFFFF)                           # uniform in [0, 2^31)
        thresh = jnp.int32(int(round(drop_p * (2.0 ** 31))))
        keep = h >= thresh
        # fold the 1/(1-p) rescale into the select (single VPU pass)
        x = jnp.where(keep, x * jnp.float32(1.0 / (1.0 - drop_p)), jnp.float32(0.0))

    # bf16 inputs to the MXU, f32 accumulation; softmax math stays f32 (v5e-safe).
    logits = jnp.dot(x.astype(jnp.bfloat16), w_ref[...],
                     preferred_element_type=jnp.float32) + b_ref[...]
    m = jnp.max(logits, axis=-1, keepdims=True)
    z = logits - m
    lse = jnp.log(jnp.sum(jnp.exp(z), axis=-1, keepdims=True))
    out_ref[0] = (z - lse).astype(out_ref.dtype)


# ----------------------------------------------------------------------------
# Kernel B: CTC alpha recursion on pre-gathered log-probs.
#   lpz_ref  : (T, BB, S_pad)  log p(z[s]) per time step for BB batch rows
#   allow_ref: (BB, S_pad)     1.0 where the s-2 "skip" transition is legal
#   t/s len  : (BB, 1) int32   valid frames / 2*target_len+1 per row
#   loss_ref : (BB, 128)       per-batch NLL broadcast across lanes
# One grid step handles 8 batch rows (full vreg sublanes); grid axis is parallel.
# ----------------------------------------------------------------------------
def _ctc_dp_kernel(tlen_ref, slen_ref, lpz_ref, allow_ref, loss_ref):
    T = lpz_ref.shape[0]
    BB = lpz_ref.shape[1]
    S = lpz_ref.shape[2]

    T_b = tlen_ref[...]                               # (BB, 1) int32
    S_b = slen_ref[...]                               # (BB, 1) int32
    allow_b = allow_ref[...] > jnp.float32(0.5)       # hoisted: computed once, not per step
    idx = lax.broadcasted_iota(jnp.int32, (1, S), 1)

    lp0 = lpz_ref[0]                                  # (BB, S)
    alpha = jnp.where((idx < 2) & (idx < S_b), lp0, NEG)
    negpad = jnp.full((BB, 2), NEG, dtype=jnp.float32)  # hoisted out of the loop

    def body(t, alpha):
        ext = jnp.concatenate([negpad, alpha], axis=1)     # (BB, S+2), single shift source
        a1 = ext[:, 1:S + 1]                               # alpha[s-1]
        a2 = jnp.where(allow_b, ext[:, :S], NEG)           # alpha[s-2] where legal
        m = jnp.maximum(jnp.maximum(alpha, a1), a2)
        lse = m + jnp.log(jnp.exp(alpha - m) + jnp.exp(a1 - m) + jnp.exp(a2 - m))
        new_alpha = lse + lpz_ref[t]
        return jnp.where(t < T_b, new_alpha, alpha)        # freeze past each row's length

    alpha = lax.fori_loop(1, T, body, alpha)

    final = jnp.where((idx == S_b - 1) | (idx == S_b - 2), alpha, NEG)
    m = jnp.max(final, axis=1, keepdims=True)
    loss = -(m + jnp.log(jnp.sum(jnp.exp(final - m), axis=1, keepdims=True)))   # (BB, 1)
    loss_ref[...] = jnp.broadcast_to(loss, loss_ref.shape)                      # lane-dense


# ----------------------------------------------------------------------------
# Module wrapper mirroring the PyTorch CTC module
# ----------------------------------------------------------------------------
class CTCPallas:
    def __init__(self, vocab_size: int, encoder_output_size: int, dropout_rate: float = 0.1,
                 param_seed: int = 0):
        self.vocab_size = vocab_size
        self.encoder_output_size = encoder_output_size
        self.dropout_rate = float(dropout_rate)
        self.v_pad = _round_up(vocab_size, 128)       # lane-dense vocab padding

        # deterministic torch.nn.Linear-style init: U(-1/sqrt(D), 1/sqrt(D))
        k = 1.0 / np.sqrt(encoder_output_size)
        kw, kb = jax.random.split(jax.random.PRNGKey(param_seed))
        w = jax.random.uniform(kw, (encoder_output_size, vocab_size), jnp.float32, -k, k)
        b = jax.random.uniform(kb, (1, vocab_size), jnp.float32, -k, k)
        self.bias = b                                                         # (1, V) f32
        # padded parameters used by the kernel: weight kept resident in bf16;
        # pad bias columns with NEG so the padded vocab never affects the softmax.
        self.weight_p = jnp.zeros((encoder_output_size, self.v_pad), jnp.float32) \
            .at[:, :vocab_size].set(w).astype(jnp.bfloat16)                   # (D, V_pad) bf16
        self.bias_p = jnp.full((1, self.v_pad), NEG, jnp.float32) \
            .at[:, :vocab_size].set(b)                                        # (1, V_pad) f32

    # --- Kernel A wrapper -----------------------------------------------------
    def _log_probs(self, encoder_out, drop_p, seed):
        B, T, D = encoder_out.shape
        Vp = self.v_pad
        TT = min(256, _round_up(T, 8))            # time tile (bounds VMEM per step)
        T_pad = _round_up(T, TT)
        x = encoder_out
        if T_pad != T:
            x = jnp.pad(x, ((0, 0), (0, T_pad - T), (0, 0)))
        n_t = T_pad // TT

        grid_spec = pltpu.PrefetchScalarGridSpec(
            num_scalar_prefetch=1,
            grid=(B, n_t),
            in_specs=[
                pl.BlockSpec((1, TT, D), lambda b, t, s: (b, t, 0)),
                pl.BlockSpec((D, Vp), lambda b, t, s: (0, 0)),
                pl.BlockSpec((1, Vp), lambda b, t, s: (0, 0)),
            ],
            out_specs=pl.BlockSpec((1, TT, Vp), lambda b, t, s: (b, t, 0)),
        )
        return pl.pallas_call(
            functools.partial(_linear_logsoftmax_kernel, drop_p=float(drop_p), tile_t=TT),
            out_shape=jax.ShapeDtypeStruct((B, T_pad, Vp), jnp.float32),
            grid_spec=grid_spec,
            compiler_params=pltpu.CompilerParams(
                dimension_semantics=("parallel", "parallel"),
                vmem_limit_bytes=48 * 1024 * 1024),
        )(jnp.asarray([seed], dtype=jnp.int32), x, self.weight_p, self.bias_p)

    # --- Kernel B wrapper (JAX glue builds the gathered DP inputs) -------------
    def _ctc_loss_sum(self, log_probs, enc_lens, y, y_lens):
        B, T, _ = log_probs.shape
        U = y.shape[1]
        S = 2 * U + 1
        S_pad = _round_up(S, 128)
        BB = 8
        B_pad = _round_up(B, BB)

        s_idx = jnp.arange(S_pad)
        is_label = ((s_idx % 2) == 1) & (s_idx < S)
        lab_pos = jnp.clip((s_idx - 1) // 2, 0, U - 1)
        y = y.astype(jnp.int32)
        z = jnp.where(is_label[None, :], y[:, lab_pos], 0)                     # (B, S_pad)

        # Real gather (no one-hot matmul): lp_z[b, t, s] = log_probs[b, t, z[b, s]]
        zi = jnp.broadcast_to(z[:, None, :], (B, T, S_pad))
        lp_z = jnp.take_along_axis(log_probs, zi, axis=2)                      # (B, T, S_pad)
        lp_z = jnp.transpose(lp_z, (1, 0, 2))                                  # (T, B, S_pad)

        z_m2 = jnp.pad(z, ((0, 0), (2, 0)))[:, :S_pad]
        allow = ((s_idx[None, :] >= 2) & is_label[None, :] & (z != z_m2)).astype(jnp.float32)

        t_lens = enc_lens.astype(jnp.int32)
        s_lens = (2 * y_lens + 1).astype(jnp.int32)

        if B_pad != B:
            pad_b = B_pad - B
            lp_z = jnp.pad(lp_z, ((0, 0), (0, pad_b), (0, 0)))
            allow = jnp.pad(allow, ((0, pad_b), (0, 0)))
            t_lens = jnp.pad(t_lens, (0, pad_b), constant_values=1)
            s_lens = jnp.pad(s_lens, (0, pad_b), constant_values=1)

        t_lens = t_lens.reshape(B_pad, 1)
        s_lens = s_lens.reshape(B_pad, 1)

        grid_spec = pltpu.PrefetchScalarGridSpec(
            num_scalar_prefetch=0,
            grid=(B_pad // BB,),
            in_specs=[
                pl.BlockSpec((BB, 1), lambda g: (g, 0)),
                pl.BlockSpec((BB, 1), lambda g: (g, 0)),
                pl.BlockSpec((T, BB, S_pad), lambda g: (0, g, 0)),
                pl.BlockSpec((BB, S_pad), lambda g: (g, 0)),
            ],
            out_specs=pl.BlockSpec((BB, 128), lambda g: (g, 0)),
        )
        out = pl.pallas_call(
            _ctc_dp_kernel,
            out_shape=jax.ShapeDtypeStruct((B_pad, 128), jnp.float32),
            grid_spec=grid_spec,
            compiler_params=pltpu.CompilerParams(dimension_semantics=("parallel",)),
        )(t_lens, s_lens, lp_z, allow)
        return jnp.sum(out[:B, 0])

    # --- public API matching the torch module ----------------------------------
    def forward(self, encoder_out, encoder_out_lens, y, y_lens, *, dropout_seed=0):
        # TODO(synk): torch's F.dropout RNG stream cannot be reproduced bit-exactly;
        #             a deterministic hash-based Bernoulli mask is used instead.
        B, T, _ = encoder_out.shape
        lp = self._log_probs(encoder_out, self.dropout_rate, dropout_seed)[:, :T, :]
        loss_sum = self._ctc_loss_sum(lp, encoder_out_lens, y, y_lens)
        # torch: loss / logits.size(1) with logits of shape (T, B, V) -> divide by batch
        return loss_sum / jnp.float32(B)

    def log_softmax(self, encoder_out):
        # matches the torch module's `log_softmax` (no dropout); strips padding
        B, T, _ = encoder_out.shape
        return self._log_probs(encoder_out, 0.0, 0)[:, :T, :self.vocab_size]


# ----------------------------------------------------------------------------
# pure-numpy CTC reference (forward algorithm) used only for verification
# ----------------------------------------------------------------------------
def _ctc_ref_numpy(log_probs, enc_lens, y, y_lens):
    log_probs = np.asarray(log_probs, dtype=np.float64)
    y = np.asarray(y)
    B = log_probs.shape[0]
    total = 0.0
    for b in range(B):
        Tb, Ub = int(enc_lens[b]), int(y_lens[b])
        lab = y[b, :Ub]
        S = 2 * Ub + 1
        z = np.zeros(S, dtype=np.int64)
        z[1::2] = lab
        lp = log_probs[b]
        alpha = np.full(S, -np.inf)
        alpha[0] = lp[0, z[0]]
        if S > 1:
            alpha[1] = lp[0, z[1]]
        for t in range(1, Tb):
            new = np.full(S, -np.inf)
            for s in range(S):
                v = alpha[s]
                if s >= 1:
                    v = np.logaddexp(v, alpha[s - 1])
                if s >= 2 and z[s] != 0 and z[s] != z[s - 2]:
                    v = np.logaddexp(v, alpha[s - 2])
                new[s] = v + lp[t, z[s]]
            alpha = new
        ll = np.logaddexp(alpha[S - 1], alpha[S - 2]) if S > 1 else alpha[S - 1]
        total += -ll
    return total / B


if __name__ == "__main__":
    B, T, D, V, U = 2, 16, 32, 16, 5
    key = jax.random.PRNGKey(0)
    kx, ky = jax.random.split(key)
    encoder_out = jax.random.normal(kx, (B, T, D), jnp.float32)
    encoder_out_lens = jnp.array([16, 12], dtype=jnp.int32)
    y = jax.random.randint(ky, (B, U), 1, V, dtype=jnp.int32)   # labels in [1, V); 0 is blank
    y_lens = jnp.array([5, 3], dtype=jnp.int32)

    ctc = CTCPallas(vocab_size=V, encoder_output_size=D, dropout_rate=0.1)

    loss = jax.block_until_ready(ctc.forward(encoder_out, encoder_out_lens, y, y_lens))

    # correctness check 1: Linear + log_softmax kernel (dropout off) vs plain JAX
    # (reference mirrors the kernel's bf16 matmul inputs, f32 accumulation).
    lp_kernel = jax.block_until_ready(ctc.log_softmax(encoder_out))
    logits_ref = jnp.einsum("btd,dv->btv", encoder_out.astype(jnp.bfloat16),
                            ctc.weight_p[:, :V],
                            preferred_element_type=jnp.float32) + ctc.bias
    lp_ref = jax.nn.log_softmax(logits_ref, axis=-1)
    np.testing.assert_allclose(np.asarray(lp_kernel), np.asarray(lp_ref), rtol=2e-2, atol=2e-2)

    # correctness check 2: CTC DP kernel vs numpy forward algorithm, fed the same
    # (dropout-applied) log-probs produced by the kernel with the same seed.
    lp_drop = jax.block_until_ready(ctc._log_probs(encoder_out, ctc.dropout_rate, 0))[:, :T, :]
    loss_ref = _ctc_ref_numpy(lp_drop, encoder_out_lens, y, y_lens)
    np.testing.assert_allclose(float(loss), float(loss_ref), rtol=2e-3, atol=1e-2)

    print("KERNEL_OK")
</pallas_src>

<mosaic_0001>
module attributes {stable_mosaic.version = 11 : i64} {
  func.func @_linear_logsoftmax_kernel(%arg0: i32, %arg1: i32, %arg2: memref<1xi32, #tpu.memory_space<smem>>, %arg3: memref<1x16x32xf32, #tpu.memory_space<vmem>>, %arg4: memref<32x128xbf16, #tpu.memory_space<vmem>>, %arg5: memref<1x128xf32, #tpu.memory_space<vmem>>, %arg6: memref<1x16x128xf32, #tpu.memory_space<vmem>>) attributes {dimension_semantics = [#tpu.dimension_semantics<parallel>, #tpu.dimension_semantics<parallel>], iteration_bounds = array<i64: 2, 1>, scalar_prefetch = 1 : i64, scratch_operands = 0 : i64, tpu.core_type = #tpu.core_type<tc>, window_params = [{transform_indices = @transform_0, window_bounds = array<i64: 1, 16, 32>}, {pipeline_mode = #tpu.pipeline_mode<synchronous>, transform_indices = @transform_1, window_bounds = array<i64: 32, 128>}, {pipeline_mode = #tpu.pipeline_mode<synchronous>, transform_indices = @transform_2, window_bounds = array<i64: 1, 128>}, {transform_indices = @transform_3, window_bounds = array<i64: 1, 16, 128>}]} {
    %c0 = arith.constant 0 : index
    %c0_0 = arith.constant 0 : index
    %c0_1 = arith.constant 0 : index
    %0 = vector.load %arg3[%c0, %c0_0, %c0_1] : memref<1x16x32xf32, #tpu.memory_space<vmem>>, vector<1x16x32xf32>
    %1 = vector.shape_cast %0 : vector<1x16x32xf32> to vector<16x32xf32>
    %c16_i32 = arith.constant 16 : i32
    %2 = arith.muli %arg1, %c16_i32 : i32
    %3 = tpu.iota {dimensions = array<i32: 0>} : vector<16x32xi32>
    %4 = vector.broadcast %2 : i32 to vector<16x32xi32>
    %5 = arith.addi %3, %4 : vector<16x32xi32>
    %6 = tpu.iota {dimensions = array<i32: 1>} : vector<16x32xi32>
    %c32_i32 = arith.constant 32 : i32
    %7 = vector.broadcast %c32_i32 : i32 to vector<16x32xi32>
    %8 = arith.muli %5, %7 : vector<16x32xi32>
    %9 = arith.addi %8, %6 : vector<16x32xi32>
    %c0_2 = arith.constant 0 : index
    %10 = memref.load %arg2[%c0_2] : memref<1xi32, #tpu.memory_space<smem>>
    %c1000003_i32 = arith.constant 1000003 : i32
    %11 = arith.muli %arg0, %c1000003_i32 : i32
    %12 = arith.addi %10, %11 : i32
    %c2654435_i32 = arith.constant 2654435 : i32
    %13 = arith.muli %12, %c2654435_i32 : i32
    %14 = vector.broadcast %13 : i32 to vector<16x32xi32>
    %15 = arith.addi %9, %14 : vector<16x32xi32>
    %c15_i32 = arith.constant 15 : i32
    %16 = vector.broadcast %c15_i32 : i32 to vector<16x32xi32>
    %17 = arith.shrsi %15, %16 : vector<16x32xi32>
    %18 = arith.xori %15, %17 : vector<16x32xi32>
    %c73244475_i32 = arith.constant 73244475 : i32
    %19 = vector.broadcast %c73244475_i32 : i32 to vector<16x32xi32>
    %20 = arith.muli %18, %19 : vector<16x32xi32>
    %c13_i32 = arith.constant 13 : i32
    %21 = vector.broadcast %c13_i32 : i32 to vector<16x32xi32>
    %22 = arith.shrsi %20, %21 : vector<16x32xi32>
    %23 = arith.xori %20, %22 : vector<16x32xi32>
    %c739982445_i32 = arith.constant 739982445 : i32
    %24 = vector.broadcast %c739982445_i32 : i32 to vector<16x32xi32>
    %25 = arith.muli %23, %24 : vector<16x32xi32>
    %c16_i32_3 = arith.constant 16 : i32
    %26 = vector.broadcast %c16_i32_3 : i32 to vector<16x32xi32>
    %27 = arith.shrsi %25, %26 : vector<16x32xi32>
    %28 = arith.xori %25, %27 : vector<16x32xi32>
    %c2147483647_i32 = arith.constant 2147483647 : i32
    %29 = vector.broadcast %c2147483647_i32 : i32 to vector<16x32xi32>
    %30 = arith.andi %28, %29 : vector<16x32xi32>
    %c214748365_i32 = arith.constant 214748365 : i32
    %31 = vector.broadcast %c214748365_i32 : i32 to vector<16x32xi32>
    %32 = arith.cmpi sge, %30, %31 : vector<16x32xi32>
    %cst = arith.constant 1.11111116 : f32
    %33 = vector.broadcast %cst : f32 to vector<16x32xf32>
    %34 = arith.mulf %1, %33 : vector<16x32xf32>
    %cst_4 = arith.constant 0.000000e+00 : f32
    %35 = vector.broadcast %cst_4 : f32 to vector<16x32xf32>
    %36 = arith.select %32, %34, %35 : vector<16x32xi1>, vector<16x32xf32>
    %37 = arith.truncf %36 : vector<16x32xf32> to vector<16x32xbf16>
    %c0_5 = arith.constant 0 : index
    %c0_6 = arith.constant 0 : index
    %38 = vector.load %arg4[%c0_5, %c0_6] : memref<32x128xbf16, #tpu.memory_space<vmem>>, vector<32x128xbf16>
    %cst_7 = arith.constant dense<0.000000e+00> : vector<16x128xf32>
    %39 = tpu.matmul %37, %38, %cst_7 {dimension_numbers = #tpu.dot_dimension_numbers<[1], [0], [0], [1], [0, 0, 1, 1], [], []>} : vector<16x32xbf16>, vector<32x128xbf16>, vector<16x128xf32> -> vector<16x128xf32>
    %c0_8 = arith.constant 0 : index
    %c0_9 = arith.constant 0 : index
    %40 = vector.load %arg5[%c0_8, %c0_9] : memref<1x128xf32, #tpu.memory_space<vmem>>, vector<1x128xf32>
    %41 = vector.broadcast %40 : vector<1x128xf32> to vector<16x128xf32>
    %42 = arith.addf %39, %41 : vector<16x128xf32>
    %cst_10 = arith.constant dense<0xFF800000> : vector<16xf32>
    %43 = vector.multi_reduction <maximumf>, %42, %cst_10 [1] : vector<16x128xf32> to vector<16xf32>
    %44 = vector.shape_cast %43 : vector<16xf32> to vector<16x1xf32>
    %45 = vector.broadcast %44 : vector<16x1xf32> to vector<16x128xf32>
    %46 = arith.subf %42, %45 : vector<16x128xf32>
    %47 = math.exp %46 : vector<16x128xf32>
    %cst_11 = arith.constant dense<0.000000e+00> : vector<16xf32>
    %48 = vector.multi_reduction <add>, %47, %cst_11 [1] : vector<16x128xf32> to vector<16xf32>
    %49 = vector.shape_cast %48 : vector<16xf32> to vector<16x1xf32>
    %50 = math.log %49 : vector<16x1xf32>
    %51 = vector.broadcast %50 : vector<16x1xf32> to vector<16x128xf32>
    %52 = arith.subf %46, %51 : vector<16x128xf32>
    %c0_12 = arith.constant 0 : index
    %c0_13 = arith.constant 0 : index
    %c0_14 = arith.constant 0 : index
    %53 = vector.load %arg6[%c0_12, %c0_13, %c0_14] : memref<1x16x128xf32, #tpu.memory_space<vmem>>, vector<1x16x128xf32>
    %54 = vector.shape_cast %53 : vector<1x16x128xf32> to vector<16x128xf32>
    %55 = vector.shape_cast %52 : vector<16x128xf32> to vector<1x16x128xf32>
    tpu.vector_store %arg6[%c0_12, %c0_13, %c0_14], %55 {strides = array<i32>} : memref<1x16x128xf32, #tpu.memory_space<vmem>>, vector<1x16x128xf32>,
    return
  }
  func.func @transform_0(%arg0: i32, %arg1: i32, %arg2: memref<1xi32, #tpu.memory_space<smem>>) -> (i32, i32, i32) {
    %c0_i32 = arith.constant 0 : i32
    %c0_i32_0 = arith.constant 0 : i32
    return %arg0, %arg1, %c0_i32 : i32, i32, i32
  }
  func.func @transform_1(%arg0: i32, %arg1: i32, %arg2: memref<1xi32, #tpu.memory_space<smem>>) -> (i32, i32) {
    %c0_i32 = arith.constant 0 : i32
    %c0_i32_0 = arith.constant 0 : i32
    %c0_i32_1 = arith.constant 0 : i32
    return %c0_i32, %c0_i32_0 : i32, i32
  }
  func.func @transform_2(%arg0: i32, %arg1: i32, %arg2: memref<1xi32, #tpu.memory_space<smem>>) -> (i32, i32) {
    %c0_i32 = arith.constant 0 : i32
    %c0_i32_0 = arith.constant 0 : i32
    %c0_i32_1 = arith.constant 0 : i32
    return %c0_i32, %c0_i32_0 : i32, i32
  }
  func.func @transform_3(%arg0: i32, %arg1: i32, %arg2: memref<1xi32, #tpu.memory_space<smem>>) -> (i32, i32, i32) {
    %c0_i32 = arith.constant 0 : i32
    %c0_i32_0 = arith.constant 0 : i32
    return %arg0, %arg1, %c0_i32 : i32, i32, i32
  }
}

</mosaic_0001>

<llo_original>
// kernel: tpu_custom_call.1
$region0: #{tpu_custom_call.1}
  #allocation0 [shape = 'u32[]', space=smem, size = 0x4, offset = 0x4, fixed_abs, tag = 'smem constant byte address 0x4 - core index']
  #allocation1 [shape = 'u32[72,128]{1,0:T(1,128)}', space=vmem, size = 0x9000, scoped, tag = 'internal scratch']
  #allocation2 [shape = 's32[1]{0}', space=sflag, size = 0x4, scoped, tag = 'scoped memory for tpu_custom_call.1']
  #allocation3 [shape = 's32[1]{0:T(128)S(6)}', space=smem, size = 0x200, scoped, tag = 'prefetched SMEM operand 0']
  %s0 = inlined_call_operand.<no memory space> [shape: s32[1], index: 0, kind: input, shape index: {}]
  %s1 = inlined_call_operand.hbm [shape: f32[2,16,32], index: 1, kind: input, shape index: {}]
  %s2 = inlined_call_operand.hbm [shape: bf16[32,128], index: 2, kind: input, shape index: {}]
  %s3 = inlined_call_operand.vmem [shape: f32[1,128], index: 3, kind: input, shape index: {}]
  %s4 = inlined_call_operand.hbm [shape: f32[2,16,128], index: 4, kind: output, shape index: {}]
  %s5 = sld [smem:[#allocation0]]
  $region53: #{tpu_custom_call.1} parent=0
    _
  %s7 = ssub.s32 1, %s5
  %s8 = scalar_select 0, %s7, %s5
  %9 = sst [smem:[#allocation3]] %s0
  $region1: #{tpu_custom_call.1} parent=0
    #allocation4 [shape = 'u8[16384]{0}', space=vmem, size = 0x4000, scoped, tag = 'input window, operand 1']
    #allocation5 [shape = 's32[2]{0}', space=sflag, size = 0x8, scoped, tag = 'scoped memory for tpu_custom_call.1']
    #allocation6 [shape = 's32[2]{0}', space=sflag, size = 0x8, scoped, tag = 'scoped memory for tpu_custom_call.1']
    #allocation7 [shape = 'u8[8192]{0}', space=vmem, size = 0x2000, scoped, tag = 'input window, operand 2, single buffered']
    #allocation8 [shape = 's32[1]{0}', space=sflag, size = 0x4, scoped, tag = 'scoped memory for tpu_custom_call.1']
    #allocation9 [shape = 'u8[16384]{0}', space=vmem, size = 0x4000, scoped, tag = 'output window, operand 0']
    %10 = vsyncpa [#allocation5], 0
    %s11 = scalar_lea.sflag [#allocation5], 1
    %12 = vsyncpa %s11, 0
    %13 = vsyncpa [#allocation8], 0
    %14 = vsyncpa [#allocation6], 0
    %s15 = scalar_lea.sflag [#allocation6], 1
    %16 = vsyncpa %s15, 0
    loop: start=0, step=1, limit=4
    $region2: #{tpu_custom_call.1} parent=1 // loop_pre_header
      _
    $region3: #{tpu_custom_call.1} parent=1 // loop_header
      %s18 = sphi 0, %s22
      %p19 = scmp.ge.s32.totalorder %s18, 4
      %s25 = sphi 0, %s37
      %s26 = sphi 0, %s33
      %s27 = sphi 0, %s25
      %s28 = sphi 0, %s26
      %s29 = sphi 0, %s27
      %s30 = sphi 0, %s28
      %s42 = sphi 0, %s44
      %s45 = sphi 0, %s42
      %s46 = sphi 0, %s45
      %s62 = sphi 0, %s46
      %s66 = sphi 0, %s66
      %s68 = sphi 0, %s66
      %s69 = sphi 0, %s68
      %s83 = sphi 0, %s69
      %s87 = sphi 0, %s87
      %s89 = sphi 0, %s87
      %s90 = sphi 0, %s89
      %s104 = sphi 0, %s90
      %s112 = sphi 0, %s114
      %s115 = sphi 0, %s112
      %s116 = sphi 0, %s115
      %s132 = sphi 0, %s116
    $region4: #{tpu_custom_call.1} parent=1 // loop_header_branch
      %21 = sbr.rel (%p19) target = $region8
    $region5: #{tpu_custom_call.1} parent=1 // loop_body
      %s23 = ssub.s32 %s18, 1
      %s24 = ssub.s32 %s18, 2
      %s31 = sadd.s32 1, %s26
      %p32 = scmp.ge.s32.totalorder %s31, 1
      %s33 = scalar_select %p32, 0, %s31
      %s34 = sadd.s32 1, %s25
      %s35 = scalar_select %p32, %s34, %s25
      %p36 = scmp.ge.s32.totalorder %s35, 2
      %s37 = scalar_select %p36, 0, %s35
      %s38 = ssub.s32 %s25, %s37
      %s39 = ssub.s32 %s26, %s33
      %s40 = sor.u32 %s38, %s39
      %p41 = scmp.eq.s32.totalorder %s40, 0
      %s43 = sadd.s32 %s42, 1
      %s44 = scalar_select %p41, %s42, %s43
      %p47 = pneg %p41
      %p48 = scmp.eq.s32.totalorder %s18, 1
      %p49 = por %p47, %p48
      %p50 = scmp.ne.s32.totalorder %s42, %s45
      %p51 = scmp.eq.s32.totalorder %s18, 0
      %p52 = por %p50, %p51
      %p53 = scmp.ne.s32.totalorder %s42, %s45
      %p54 = scmp.eq.s32.totalorder %s23, 1
      %p55 = por %p53, %p54
      %p56 = scmp.ne.s32.totalorder %s45, %s46
      %p57 = scmp.eq.s32.totalorder %s23, 0
      %p58 = por %p56, %p57
      %p59 = scmp.ne.s32.totalorder %s45, %s46
      %p60 = scmp.eq.s32.totalorder %s24, 1
      %p61 = por %p59, %p60
      %p63 = scmp.ne.s32.totalorder %s46, %s62
      %p64 = scmp.eq.s32.totalorder %s24, 0
      %p65 = por %p63, %p64
      %s67 = sadd.s32 %s66, 1
      %p70 = scmp.eq.s32.totalorder %s18, 1
      %p71 = scmp.ne.s32.totalorder %s66, %s68
      %p72 = scmp.eq.s32.totalorder %s18, 0
      %p73 = por %p71, %p72
      %p74 = scmp.ne.s32.totalorder %s66, %s68
      %p75 = scmp.eq.s32.totalorder %s23, 1
      %p76 = por %p74, %p75
      %p77 = scmp.ne.s32.totalorder %s68, %s69
      %p78 = scmp.eq.s32.totalorder %s23, 0
      %p79 = por %p77, %p78
      %p80 = scmp.ne.s32.totalorder %s68, %s69
      %p81 = scmp.eq.s32.totalorder %s24, 1
      %p82 = por %p80, %p81
      %p84 = scmp.ne.s32.totalorder %s69, %s83
      %p85 = scmp.eq.s32.totalorder %s24, 0
      %p86 = por %p84, %p85
      %s88 = sadd.s32 %s87, 1
      %p91 = scmp.eq.s32.totalorder %s18, 1
      %p92 = scmp.ne.s32.totalorder %s87, %s89
      %p93 = scmp.eq.s32.totalorder %s18, 0
      %p94 = por %p92, %p93
      %p95 = scmp.ne.s32.totalorder %s87, %s89
      %p96 = scmp.eq.s32.totalorder %s23, 1
      %p97 = por %p95, %p96
      %p98 = scmp.ne.s32.totalorder %s89, %s90
      %p99 = scmp.eq.s32.totalorder %s23, 0
      %p100 = por %p98, %p99
      %p101 = scmp.ne.s32.totalorder %s89, %s90
      %p102 = scmp.eq.s32.totalorder %s24, 1
      %p103 = por %p101, %p102
      %p105 = scmp.ne.s32.totalorder %s90, %s104
      %p106 = scmp.eq.s32.totalorder %s24, 0
      %p107 = por %p105, %p106
      %s108 = ssub.s32 %s25, %s37
      %s109 = ssub.s32 %s26, %s33
      %s110 = sor.u32 %s108, %s109
      %p111 = scmp.eq.s32.totalorder %s110, 0
      %s113 = sadd.s32 %s112, 1
      %s114 = scalar_select %p111, %s112, %s113
      %p117 = pneg %p111
      %p118 = scmp.eq.s32.totalorder %s18, 1
      %p119 = por %p117, %p118
      %p120 = scmp.ne.s32.totalorder %s112, %s115
      %p121 = scmp.eq.s32.totalorder %s18, 0
      %p122 = por %p120, %p121
      %p123 = scmp.ne.s32.totalorder %s112, %s115
      %p124 = scmp.eq.s32.totalorder %s23, 1
      %p125 = por %p123, %p124
      %p126 = scmp.ne.s32.totalorder %s115, %s116
      %p127 = scmp.eq.s32.totalorder %s23, 0
      %p128 = por %p126, %p127
      %p129 = scmp.ne.s32.totalorder %s115, %s116
      %p130 = scmp.eq.s32.totalorder %s24, 1
      %p131 = por %p129, %p130
      %p133 = scmp.ne.s32.totalorder %s116, %s132
      %p134 = scmp.eq.s32.totalorder %s24, 0
      %p135 = por %p133, %p134
      %p136 = scmp.le.s32.totalorder 1, %s18
      %p137 = scmp.lt.s32.totalorder %s18, 3
      %p138 = pnand %p136, %p137
      %p139 = pneg %p138
      // Predicated region
      $region9: #{tpu_custom_call.1} parent=5 // pred_check
        _
      $region10: #{tpu_custom_call.1} parent=5 // pred_check_branch
        %141 = sbr.rel (%p138) target = $region12
      $region11: #{tpu_custom_call.1} parent=5 // pred_region
        %s142 = ssub.s32 %s18, 1
        // Predicated region
        $region13: #{tpu_custom_call.1} parent=11 // pred_check
          %p143 = pneg %p79
        $region14: #{tpu_custom_call.1} parent=11 // pred_check_branch
          %145 = sbr.rel (%p143) target = $region16
        $region15: #{tpu_custom_call.1} parent=11 // pred_region
          %147 = vsyncadd [#allocation8], 0
          %s148 = sshll.u32 %s2, 4
          %s149 = int_to_ptr.hbm [resolvable:$true] %s148
          %s150 = sshll.u32 [#allocation7], 4
          %s151 = int_to_ptr.vmem [resolvable:$true] %s150
          %156 = dma.hbm_to_vmem [thread:$0]  %s149, 256, %s151, [#allocation8], 64, 64, 4
        $region16: #{tpu_custom_call.1} parent=11 // pred_fallthru
          _
        // Predicated region
        $region17: #{tpu_custom_call.1} parent=11 // pred_check
          %p157 = pneg %p100
        $region18: #{tpu_custom_call.1} parent=11 // pred_check_branch
          %159 = sbr.rel (%p157) target = $region20
        $region19: #{tpu_custom_call.1} parent=11 // pred_region
          _
        $region20: #{tpu_custom_call.1} parent=11 // pred_fallthru
          _
      $region12: #{tpu_custom_call.1} parent=5 // pred_fallthru
        _
      %p160 = scmp.lt.s32.totalorder %s18, 2
      // Predicated region
      $region21: #{tpu_custom_call.1} parent=5 // pred_check
        %p161 = pneg %p160
      $region22: #{tpu_custom_call.1} parent=5 // pred_check_branch
        %163 = sbr.rel (%p161) target = $region24
      $region23: #{tpu_custom_call.1} parent=5 // pred_region
        // Predicated region
        $region25: #{tpu_custom_call.1} parent=23 // pred_check
          %p164 = pneg %p52
        $region26: #{tpu_custom_call.1} parent=23 // pred_check_branch
          %166 = sbr.rel (%p164) target = $region28
        $region27: #{tpu_custom_call.1} parent=23 // pred_region
          %s167 = sand.u32 %s42, 1
          %s168 = scalar_lea.sflag [#allocation5], %s167
          %s169 = sand.u32 %s42, 1
          %s170 = smul.addr %s169, 16
          %s171 = scalar_lea.vmem [#allocation4], %s170
          %s172 = smul.u32 2, %s26
          %174 = vsyncadd %s168, 0
          %s175 = smul.addr %s25, 2
          %s176 = sadd.s32 %s172, %s175
          %s177 = smul.addr %s176, 8
          %s178 = scalar_lea.hbm %s1, %s177
          %s179 = sshll.u32 %s178, 4
          %s180 = int_to_ptr.hbm [resolvable:$true] %s179
          %s181 = sshll.u32 %s171, 4
          %s182 = int_to_ptr.vmem [resolvable:$true] %s181
          %187 = dma.hbm_to_vmem [thread:$0]  %s180, 256, %s182, %s168, 128, 128, 8
        $region28: #{tpu_custom_call.1} parent=23 // pred_fallthru
          _
      $region24: #{tpu_custom_call.1} parent=5 // pred_fallthru
        _
      %p188 = scmp.le.s32.totalorder 1, %s18
      %p189 = scmp.lt.s32.totalorder %s18, 3
      %p190 = pnand %p188, %p189
      %p191 = pneg %p190
      // Predicated region
      $region29: #{tpu_custom_call.1} parent=5 // pred_check
        _
      $region30: #{tpu_custom_call.1} parent=5 // pred_check_branch
        %193 = sbr.rel (%p190) target = $region32
      $region31: #{tpu_custom_call.1} parent=5 // pred_region
        %s194 = ssub.s32 %s18, 1
        %s195 = sand.u32 %s45, 1
        %s196 = scalar_lea.sflag [#allocation5], %s195
        %s197 = sand.u32 %s45, 1
        %s198 = smul.addr %s197, 16
        %s199 = scalar_lea.vmem [#allocation4], %s198
        // Predicated region
        $region33: #{tpu_custom_call.1} parent=31 // pred_check
          %p200 = pneg %p58
        $region34: #{tpu_custom_call.1} parent=31 // pred_check_branch
          %202 = sbr.rel (%p200) target = $region36
        $region35: #{tpu_custom_call.1} parent=31 // pred_region
          %204 = dma.done %s196, 256
        $region36: #{tpu_custom_call.1} parent=31 // pred_fallthru
          _
        // Predicated region
        $region37: #{tpu_custom_call.1} parent=31 // pred_check
          %p205 = pneg %p79
        $region38: #{tpu_custom_call.1} parent=31 // pred_check_branch
          %207 = sbr.rel (%p205) target = $region40
        $region39: #{tpu_custom_call.1} parent=31 // pred_region
          %209 = dma.done [#allocation8], 256
        $region40: #{tpu_custom_call.1} parent=31 // pred_fallthru
          _
        %s210 = sand.u32 %s45, 1
        %s211 = scalar_lea.sflag [#allocation5], %s210
        %s212 = sand.u32 %s45, 1
        %s213 = smul.addr %s212, 16
        %s214 = scalar_lea.vmem [#allocation4], %s213
        %p215 = pneg %p58
        %p216 = pneg %p55
        %p217 = pneg %p79
        %p218 = pneg %p76
        %p219 = pneg %p100
        %p220 = pneg %p97
        %p221 = pneg %p128
        %p222 = pneg %p125
        %s223 = sand.u32 %s115, 1
        %s224 = scalar_lea.sflag [#allocation6], %s223
        %s225 = sand.u32 %s115, 1
        %s226 = smul.addr %s225, 16
        %s227 = scalar_lea.vmem [#allocation9], %s226
        %s228 = smul.u32 2, %s28
        %s229 = smul.u32 2, %s28
        %v231 = vld [vmem:[%s199] sm:$0xff]
        %v232 = vld [vmem:[%s199 + $0x8] sm:$0xff]
        %s233 = smul.u32 %s28, 16
        %v234 = vlaneseq
        %v235 = vshrl.u32 %v234, 7
        %v236 = vadd.s32 %v235, 8
        %v237 = vstv %s233
        %v238 = vadd.s32 %v235, %v237
        %v239 = vadd.s32 %v236, %v237
        %v240 = vlaneseq
        %v241 = vand.u32 %v240, 127
        %v242 = vmul.u32 %v238, 32
        %v243 = vmul.u32 %v239, 32
        %v244 = vadd.s32 %v242, %v241
        %v245 = vadd.s32 %v243, %v241
        %s246 = sld [smem:[#allocation3]]
        %s247 = smul.u32 %s27, 1000003
        %s248 = sadd.s32 %s246, %s247
        %s249 = smul.u32 %s248, 2654435
        %v250 = vstv %s249
        %v251 = vadd.s32 %v244, %v250
        %v252 = vadd.s32 %v245, %v250
        %v253 = vshra.s32 %v251, 15
        %v254 = vshra.s32 %v252, 15
        %v255 = vxor.u32 %v251, %v253
        %v256 = vxor.u32 %v252, %v254
        %v257 = vmul.u32 %v255, 73244475
        %v258 = vmul.u32 %v256, 73244475
        %v259 = vshra.s32 %v257, 13
        %v260 = vshra.s32 %v258, 13
        %v261 = vxor.u32 %v257, %v259
        %v262 = vxor.u32 %v258, %v260
        %v263 = vmul.u32 %v261, 739982445
        %v264 = vmul.u32 %v262, 739982445
        %v265 = vshra.s32 %v263, 16
        %v266 = vshra.s32 %v264, 16
        %v267 = vxor.u32 %v263, %v265
        %v268 = vxor.u32 %v264, %v266
        %v269 = vand.u32 %v267, 2147483647
        %v270 = vand.u32 %v268, 2147483647
        %vm271 = vcmp.ge.s32.totalorder %v269, 214748365
        %vm272 = vcmp.ge.s32.totalorder %v270, 214748365
        %v273 = vmul.f32 %v231, 1.1111112
        %v274 = vmul.f32 %v232, 1.1111112
        %v275 = vsel %vm271, %v273, 0.0
        %v276 = vsel %vm272, %v274, 0.0
        %v277 = vpack.c.bf16 %v276, %v275
        %v278 = vld [vmem:[#allocation7] sm:$0xf]
        %v279 = vld [vmem:[#allocation7 + $0x4] sm:$0xf]
        %v280 = vld [vmem:[#allocation7 + $0x8] sm:$0xf]
        %v281 = vld [vmem:[#allocation7 + $0xc] sm:$0xf]
        %v282 = vld [vmem:[%s3] sm:$0x1]
        %v284 = vperm.slane %v282, 0
        %v290 = vunpack.c.l.b16 %v278
        %v291 = vunpack.c.l.b16 %v279
        %v292 = vunpack.c.l.b16 %v280
        %v293 = vunpack.c.l.b16 %v281
        %v294 = vpack.c.b16 %v291, %v290
        %v295 = vpack.c.b16 %v293, %v292
        %vm298 = vcmask 261120
        %v300 = vsel %vm298, %v277, 0
        %302 = vmatpush.bf16.msra.mxu0 0
        %303 = vmatpush.bf16.msra.mxu0 0
        %304 = vmatpush.bf16.msra.mxu0 0
        %305 = vmatpush.bf16.msra.mxu0 0
        %306 = vmatpush.bf16.msra.mxu0 0
        %307 = vmatpush.bf16.msra.mxu0 0
        %308 = vmatpush.bf16.msra.mxu0 %v295
        %309 = vmatpush.bf16.msra.mxu0 %v294
        %310 = vmatmul.bf16.gmra.mxu0 %v300
        %v311 = vpop.f32.mrf.mxu0
        %v312 = vadd.f32 %v284, %v311
        %v313 = vpop.f32.mrf.mxu0
        %v314 = vadd.f32 %v284, %v313
        %315 = vdwg.mxu0
        %316 = vmax.xlane.f32.xlu0 %v312
        %v317 = vpop.xlane.xlu0 %316
        %318 = vmax.xlane.f32.xlu0 %v314
        %v319 = vpop.xlane.xlu0 %318
        %v320 = vsub.f32 %v312, %v317
        %v321 = vsub.f32 %v314, %v319
        %v322 = vmul.f32 %v320, 1.442695
        %v323 = vpow.pop %v322
        %v324 = vmul.f32 %v321, 1.442695
        %v325 = vpow.pop %v324
        %326 = vadd.xlane.f32.xlu0 %v323
        %v327 = vpop.xlane.xlu0 %326
        %328 = vadd.xlane.f32.xlu0 %v325
        %v329 = vpop.xlane.xlu0 %328
        %v330 = vlog2.pop %v327
        %v331 = vmul.f32 %v330, 0.6931472
        %v332 = vlog2.pop %v329
        %v333 = vmul.f32 %v332, 0.6931472
        %v334 = vsub.f32 %v320, %v331
        %v335 = vsub.f32 %v321, %v333
        %336 = vst [vmem:[%s227] sm:$0xff] %v334
        %337 = vst [vmem:[%s227 + $0x8] sm:$0xff] %v335
        %s338 = sand.u32 %s115, 1
        %s339 = scalar_lea.sflag [#allocation6], %s338
        %s340 = sand.u32 %s115, 1
        %s341 = smul.addr %s340, 16
        %s342 = scalar_lea.vmem [#allocation9], %s341
        // Predicated region
        $region41: #{tpu_custom_call.1} parent=31 // pred_check
          %p343 = pneg %p125
        $region42: #{tpu_custom_call.1} parent=31 // pred_check_branch
          %345 = sbr.rel (%p343) target = $region44
        $region43: #{tpu_custom_call.1} parent=31 // pred_region
          %s346 = smul.u32 2, %s28
          %348 = vsyncadd %s339, 0
          %s349 = smul.addr %s27, 2
          %s350 = sadd.s32 %s346, %s349
          %s351 = smul.addr %s350, 8
          %s352 = scalar_lea.hbm %s4, %s351
          %s353 = sshll.u32 %s342, 4
          %s354 = int_to_ptr.vmem [resolvable:$true] %s353
          %s355 = sshll.u32 %s352, 4
          %s356 = int_to_ptr.hbm [resolvable:$true] %s355
          %361 = dma.vmem_to_hbm [thread:$0]  %s354, 256, %s356, %s339, 128, 128, 8
        $region44: #{tpu_custom_call.1} parent=31 // pred_fallthru
          _
      $region32: #{tpu_custom_call.1} parent=5 // pred_fallthru
        _
      %p362 = scmp.le.s32.totalorder 2, %s18
      // Predicated region
      $region45: #{tpu_custom_call.1} parent=5 // pred_check
        %p363 = pneg %p362
      $region46: #{tpu_custom_call.1} parent=5 // pred_check_branch
        %365 = sbr.rel (%p363) target = $region48
      $region47: #{tpu_custom_call.1} parent=5 // pred_region
        %s366 = ssub.s32 %s18, 2
        // Predicated region
        $region49: #{tpu_custom_call.1} parent=47 // pred_check
          %p367 = pneg %p131
        $region50: #{tpu_custom_call.1} parent=47 // pred_check_branch
          %369 = sbr.rel (%p367) target = $region52
        $region51: #{tpu_custom_call.1} parent=47 // pred_region
          %s370 = sand.u32 %s116, 1
          %s371 = scalar_lea.sflag [#allocation6], %s370
          %s372 = sand.u32 %s116, 1
          %s373 = smul.addr %s372, 16
          %s374 = scalar_lea.vmem [#allocation9], %s373
          %376 = dma.done %s371, 256
        $region52: #{tpu_custom_call.1} parent=47 // pred_fallthru
          _
      $region48: #{tpu_custom_call.1} parent=5 // pred_fallthru
        _
    $region6: #{tpu_custom_call.1} parent=1 // loop_footer
      %s22 = sadd.s32 1, %s18
    $region7: #{tpu_custom_call.1} parent=1 // loop_footer_branch
      %17 = sbr.rel target = $region3
    $region8: #{tpu_custom_call.1} parent=1 // loop_exit
      _
    %377 = vsyncpa [#allocation5], 1
    %s378 = scalar_lea.sflag [#allocation5], 1
    %379 = vsyncpa %s378, 1
    %380 = vsyncpa [#allocation8], 1
    %381 = vsyncpa [#allocation6], 1
    %s382 = scalar_lea.sflag [#allocation6], 1
    %383 = vsyncpa %s382, 1

</llo_original>
